<compile_context>
chip_gen: v5e
topology: v5e:2x2
jax: 0.10.0
libtpu: 0.0.40
codegen_flags: <defaults>
</compile_context>

<pallas_src>
import jax
import jax.numpy as jnp
from jax.experimental import pallas as pl
from jax.experimental.pallas import tpu as pltpu

_LANE = 128
_SUBLANE = 8


def _round_up(x, m):
    return ((x + m - 1) // m) * m


def _fc_shift_kernel(xc_ref, w1_ref, b1_ref, w2_ref, b2_ref, w3_ref, b3_ref,
                     o_ref):
    # Layer 1: Linear(input_dim + class_dim, inner_dim) + ReLU
    h = (jnp.dot(xc_ref[...], w1_ref[...], preferred_element_type=jnp.float32)
         + b1_ref[...])
    h = jnp.maximum(h, 0.0)
    # Dropout(p=0.2) -> identity at inference.

    # Layer 2: Linear(inner_dim, inner_dim) + ReLU
    h = (jnp.dot(h, w2_ref[...], preferred_element_type=jnp.float32)
         + b2_ref[...])
    h = jnp.maximum(h, 0.0)
    # Dropout(p=0.1) -> identity at inference.

    # Layer 3: Linear(inner_dim, output_dim) -- N already padded to 128 lanes.
    out = (jnp.dot(h, w3_ref[...], preferred_element_type=jnp.float32)
           + b3_ref[...])
    o_ref[...] = out.astype(o_ref.dtype)


def fc_shift_predictor(x, c, params, *, tile_b=512):
    """Forward pass of FCShiftPredictor (inference) as one Pallas call."""
    B, input_dim = x.shape
    class_dim = c.shape[1]
    w1, b1 = params["w1"], params["b1"]
    w2, b2 = params["w2"], params["b2"]
    w3, b3 = params["w3"], params["b3"]

    k1 = input_dim + class_dim
    inner_dim = w2.shape[0]
    out_dim = w3.shape[1]
    out_pad = _round_up(max(out_dim, _LANE), _LANE)   # lane-dense output width

    # Fuse torch.cat((x, c), 1) in the wrapper -> single K=k1 matmul in-kernel.
    xc = jnp.concatenate(
        [x.astype(jnp.float32), c.astype(jnp.float32)], axis=1)

    # Batch tiling (tile must be a multiple of 8 sublanes and divide padded B).
    tb = min(tile_b, _round_up(B, _SUBLANE))
    tb = _round_up(tb, _SUBLANE)
    bp = _round_up(B, tb)
    if bp != B:
        xc = jnp.pad(xc, ((0, bp - B), (0, 0)))

    # Zero-pad layer-3 weight/bias lanes (exact for the valid output columns).
    w1f = w1.astype(jnp.float32)
    w2f = w2.astype(jnp.float32)
    b1f = b1.astype(jnp.float32).reshape(1, inner_dim)
    b2f = b2.astype(jnp.float32).reshape(1, inner_dim)
    w3f = jnp.pad(w3.astype(jnp.float32), ((0, 0), (0, out_pad - out_dim)))
    b3f = jnp.pad(b3.astype(jnp.float32).reshape(1, out_dim),
                  ((0, 0), (0, out_pad - out_dim)))

    grid = (bp // tb,)

    def batch_map(i):
        return (i, 0)

    def const_map(i):
        return (0, 0)

    # Scoped-VMEM budget: double-buffered activation tiles + resident weights.
    act_bytes = 2 * 2 * tb * (k1 + out_pad) * 4
    wgt_bytes = 4 * (k1 * inner_dim + inner_dim
                     + inner_dim * inner_dim + inner_dim
                     + inner_dim * out_pad + out_pad)
    vmem_limit = min(max(2 * (act_bytes + wgt_bytes) + (8 << 20), 32 << 20),
                     64 << 20)

    out_padded = pl.pallas_call(
        _fc_shift_kernel,
        out_shape=jax.ShapeDtypeStruct((bp, out_pad), jnp.float32),
        grid=grid,
        in_specs=[
            pl.BlockSpec((tb, k1), batch_map),            # x_c tile
            pl.BlockSpec((k1, inner_dim), const_map),     # w1 (resident)
            pl.BlockSpec((1, inner_dim), const_map),      # b1
            pl.BlockSpec((inner_dim, inner_dim), const_map),  # w2
            pl.BlockSpec((1, inner_dim), const_map),      # b2
            pl.BlockSpec((inner_dim, out_pad), const_map),    # w3 (lane-padded)
            pl.BlockSpec((1, out_pad), const_map),        # b3 (lane-padded)
        ],
        out_specs=pl.BlockSpec((tb, out_pad), batch_map),
        compiler_params=pltpu.CompilerParams(
            dimension_semantics=("parallel",),
            vmem_limit_bytes=int(vmem_limit),
        ),
    )(xc, w1f, b1f, w2f, b2f, w3f, b3f)

    return out_padded[:B, :out_dim]


def init_params(key, input_dim, class_dim, inner_dim, output_dim):
    """Deterministic init mimicking PyTorch Linear's U(-1/sqrt(fan_in), ...).

    Weights are stored (in_features, out_features), i.e. transposed vs. PyTorch.
    """
    ks = jax.random.split(key, 6)
    fan1 = input_dim + class_dim

    def u(k, shape, fan_in):
        bound = 1.0 / jnp.sqrt(jnp.float32(fan_in))
        return jax.random.uniform(k, shape, jnp.float32, -bound, bound)

    return {
        "w1": u(ks[0], (fan1, inner_dim), fan1),
        "b1": u(ks[1], (inner_dim,), fan1),
        "w2": u(ks[2], (inner_dim, inner_dim), inner_dim),
        "b2": u(ks[3], (inner_dim,), inner_dim),
        "w3": u(ks[4], (inner_dim, output_dim), inner_dim),
        "b3": u(ks[5], (output_dim,), inner_dim),
    }


def reference_forward(x, c, params):
    """Pure-JAX reference for correctness check (eval mode: dropout = id)."""
    xc = jnp.concatenate([x, c], axis=1)
    h = jax.nn.relu(xc @ params["w1"] + params["b1"])
    h = jax.nn.relu(h @ params["w2"] + params["b2"])
    return h @ params["w3"] + params["b3"]


if __name__ == "__main__":
    # Small shapes consistent with the module's forward:
    #   x: (B, input_dim), c: (B, class_dim) -> out: (B, output_dim)
    input_dim, class_dim, inner_dim, output_dim = 16, 8, 32, 4

    key = jax.random.PRNGKey(0)
    kx, kc, kp = jax.random.split(key, 3)
    params = init_params(kp, input_dim, class_dim, inner_dim, output_dim)

    # Case 1: tiny batch, single grid step.
    B1 = 8
    x1 = jax.random.normal(kx, (B1, input_dim), jnp.float32)
    c1 = jax.random.normal(kc, (B1, class_dim), jnp.float32)
    out1 = jax.block_until_ready(fc_shift_predictor(x1, c1, params))
    ref1 = reference_forward(x1, c1, params)
    assert out1.shape == (B1, output_dim)
    assert jnp.allclose(out1, ref1, atol=1e-5, rtol=1e-5)

    # Case 2: non-multiple batch with multiple grid steps (exercises batch
    # padding, the grid pipeline and the lane-padded output slice).
    B2 = 37
    x2 = jax.random.normal(jax.random.fold_in(kx, 1), (B2, input_dim), jnp.float32)
    c2 = jax.random.normal(jax.random.fold_in(kc, 1), (B2, class_dim), jnp.float32)
    out2 = jax.block_until_ready(fc_shift_predictor(x2, c2, params, tile_b=16))
    ref2 = reference_forward(x2, c2, params)
    assert out2.shape == (B2, output_dim)
    assert jnp.allclose(out2, ref2, atol=1e-5, rtol=1e-5)

    print("KERNEL_OK")
</pallas_src>

<mosaic_0001>
module attributes {stable_mosaic.version = 11 : i64} {
  func.func @_fc_shift_kernel(%arg0: i32, %arg1: memref<8x24xf32, #tpu.memory_space<vmem>>, %arg2: memref<24x32xf32, #tpu.memory_space<vmem>>, %arg3: memref<1x32xf32, #tpu.memory_space<vmem>>, %arg4: memref<32x32xf32, #tpu.memory_space<vmem>>, %arg5: memref<1x32xf32, #tpu.memory_space<vmem>>, %arg6: memref<32x128xf32, #tpu.memory_space<vmem>>, %arg7: memref<1x128xf32, #tpu.memory_space<vmem>>, %arg8: memref<8x128xf32, #tpu.memory_space<vmem>>) attributes {dimension_semantics = [#tpu.dimension_semantics<parallel>], iteration_bounds = array<i64: 1>, scalar_prefetch = 0 : i64, scratch_operands = 0 : i64, tpu.core_type = #tpu.core_type<tc>, window_params = [{transform_indices = @transform_0, window_bounds = array<i64: 8, 24>}, {pipeline_mode = #tpu.pipeline_mode<synchronous>, transform_indices = @transform_1, window_bounds = array<i64: 24, 32>}, {pipeline_mode = #tpu.pipeline_mode<synchronous>, transform_indices = @transform_2, window_bounds = array<i64: 1, 32>}, {pipeline_mode = #tpu.pipeline_mode<synchronous>, transform_indices = @transform_3, window_bounds = array<i64: 32, 32>}, {pipeline_mode = #tpu.pipeline_mode<synchronous>, transform_indices = @transform_4, window_bounds = array<i64: 1, 32>}, {pipeline_mode = #tpu.pipeline_mode<synchronous>, transform_indices = @transform_5, window_bounds = array<i64: 32, 128>}, {pipeline_mode = #tpu.pipeline_mode<synchronous>, transform_indices = @transform_6, window_bounds = array<i64: 1, 128>}, {transform_indices = @transform_7, window_bounds = array<i64: 8, 128>}]} {
    %c0 = arith.constant 0 : index
    %c0_0 = arith.constant 0 : index
    %0 = vector.load %arg1[%c0, %c0_0] : memref<8x24xf32, #tpu.memory_space<vmem>>, vector<8x24xf32>
    %c0_1 = arith.constant 0 : index
    %c0_2 = arith.constant 0 : index
    %1 = vector.load %arg2[%c0_1, %c0_2] : memref<24x32xf32, #tpu.memory_space<vmem>>, vector<24x32xf32>
    %cst = arith.constant dense<0.000000e+00> : vector<8x32xf32>
    %2 = tpu.matmul %0, %1, %cst {dimension_numbers = #tpu.dot_dimension_numbers<[1], [0], [0], [1], [0, 0, 1, 1], [], []>} : vector<8x24xf32>, vector<24x32xf32>, vector<8x32xf32> -> vector<8x32xf32>
    %c0_3 = arith.constant 0 : index
    %c0_4 = arith.constant 0 : index
    %3 = vector.load %arg3[%c0_3, %c0_4] : memref<1x32xf32, #tpu.memory_space<vmem>>, vector<1x32xf32>
    %4 = vector.broadcast %3 : vector<1x32xf32> to vector<8x32xf32>
    %5 = arith.addf %2, %4 : vector<8x32xf32>
    %cst_5 = arith.constant 0.000000e+00 : f32
    %6 = vector.broadcast %cst_5 : f32 to vector<8x32xf32>
    %7 = arith.maximumf %5, %6 : vector<8x32xf32>
    %c0_6 = arith.constant 0 : index
    %c0_7 = arith.constant 0 : index
    %8 = vector.load %arg4[%c0_6, %c0_7] : memref<32x32xf32, #tpu.memory_space<vmem>>, vector<32x32xf32>
    %cst_8 = arith.constant dense<0.000000e+00> : vector<8x32xf32>
    %9 = tpu.matmul %7, %8, %cst_8 {dimension_numbers = #tpu.dot_dimension_numbers<[1], [0], [0], [1], [0, 0, 1, 1], [], []>} : vector<8x32xf32>, vector<32x32xf32>, vector<8x32xf32> -> vector<8x32xf32>
    %c0_9 = arith.constant 0 : index
    %c0_10 = arith.constant 0 : index
    %10 = vector.load %arg5[%c0_9, %c0_10] : memref<1x32xf32, #tpu.memory_space<vmem>>, vector<1x32xf32>
    %11 = vector.broadcast %10 : vector<1x32xf32> to vector<8x32xf32>
    %12 = arith.addf %9, %11 : vector<8x32xf32>
    %cst_11 = arith.constant 0.000000e+00 : f32
    %13 = vector.broadcast %cst_11 : f32 to vector<8x32xf32>
    %14 = arith.maximumf %12, %13 : vector<8x32xf32>
    %c0_12 = arith.constant 0 : index
    %c0_13 = arith.constant 0 : index
    %15 = vector.load %arg6[%c0_12, %c0_13] : memref<32x128xf32, #tpu.memory_space<vmem>>, vector<32x128xf32>
    %cst_14 = arith.constant dense<0.000000e+00> : vector<8x128xf32>
    %16 = tpu.matmul %14, %15, %cst_14 {dimension_numbers = #tpu.dot_dimension_numbers<[1], [0], [0], [1], [0, 0, 1, 1], [], []>} : vector<8x32xf32>, vector<32x128xf32>, vector<8x128xf32> -> vector<8x128xf32>
    %c0_15 = arith.constant 0 : index
    %c0_16 = arith.constant 0 : index
    %17 = vector.load %arg7[%c0_15, %c0_16] : memref<1x128xf32, #tpu.memory_space<vmem>>, vector<1x128xf32>
    %18 = vector.broadcast %17 : vector<1x128xf32> to vector<8x128xf32>
    %19 = arith.addf %16, %18 : vector<8x128xf32>
    %c0_17 = arith.constant 0 : index
    %c0_18 = arith.constant 0 : index
    %20 = vector.load %arg8[%c0_17, %c0_18] : memref<8x128xf32, #tpu.memory_space<vmem>>, vector<8x128xf32>
    tpu.vector_store %arg8[%c0_17, %c0_18], %19 {strides = array<i32>} : memref<8x128xf32, #tpu.memory_space<vmem>>, vector<8x128xf32>,
    return
  }
  func.func @transform_0(%arg0: i32) -> (i32, i32) {
    %c0_i32 = arith.constant 0 : i32
    %c0_i32_0 = arith.constant 0 : i32
    return %arg0, %c0_i32 : i32, i32
  }
  func.func @transform_1(%arg0: i32) -> (i32, i32) {
    %c0_i32 = arith.constant 0 : i32
    %c0_i32_0 = arith.constant 0 : i32
    %c0_i32_1 = arith.constant 0 : i32
    return %c0_i32, %c0_i32_0 : i32, i32
  }
  func.func @transform_2(%arg0: i32) -> (i32, i32) {
    %c0_i32 = arith.constant 0 : i32
    %c0_i32_0 = arith.constant 0 : i32
    %c0_i32_1 = arith.constant 0 : i32
    return %c0_i32, %c0_i32_0 : i32, i32
  }
  func.func @transform_3(%arg0: i32) -> (i32, i32) {
    %c0_i32 = arith.constant 0 : i32
    %c0_i32_0 = arith.constant 0 : i32
    %c0_i32_1 = arith.constant 0 : i32
    return %c0_i32, %c0_i32_0 : i32, i32
  }
  func.func @transform_4(%arg0: i32) -> (i32, i32) {
    %c0_i32 = arith.constant 0 : i32
    %c0_i32_0 = arith.constant 0 : i32
    %c0_i32_1 = arith.constant 0 : i32
    return %c0_i32, %c0_i32_0 : i32, i32
  }
  func.func @transform_5(%arg0: i32) -> (i32, i32) {
    %c0_i32 = arith.constant 0 : i32
    %c0_i32_0 = arith.constant 0 : i32
    %c0_i32_1 = arith.constant 0 : i32
    return %c0_i32, %c0_i32_0 : i32, i32
  }
  func.func @transform_6(%arg0: i32) -> (i32, i32) {
    %c0_i32 = arith.constant 0 : i32
    %c0_i32_0 = arith.constant 0 : i32
    %c0_i32_1 = arith.constant 0 : i32
    return %c0_i32, %c0_i32_0 : i32, i32
  }
  func.func @transform_7(%arg0: i32) -> (i32, i32) {
    %c0_i32 = arith.constant 0 : i32
    %c0_i32_0 = arith.constant 0 : i32
    return %arg0, %c0_i32 : i32, i32
  }
}

</mosaic_0001>

<llo_original>
// kernel: tpu_custom_call.1
$region0: #{tpu_custom_call.1}
  #allocation0 [shape = 'u32[]', space=smem, size = 0x4, offset = 0x4, fixed_abs, tag = 'smem constant byte address 0x4 - core index']
  #allocation1 [shape = 'u32[72,128]{1,0:T(1,128)}', space=vmem, size = 0x9000, scoped, tag = 'internal scratch']
  %s0 = inlined_call_operand.hbm [shape: f32[8,24], index: 0, kind: input, shape index: {}]
  %s1 = inlined_call_operand.hbm [shape: f32[24,32], index: 1, kind: input, shape index: {}]
  %s2 = inlined_call_operand.vmem [shape: f32[1,32], index: 2, kind: input, shape index: {}]
  %s3 = inlined_call_operand.hbm [shape: f32[32,32], index: 3, kind: input, shape index: {}]
  %s4 = inlined_call_operand.vmem [shape: f32[1,32], index: 4, kind: input, shape index: {}]
  %s5 = inlined_call_operand.hbm [shape: f32[32,128], index: 5, kind: input, shape index: {}]
  %s6 = inlined_call_operand.vmem [shape: f32[1,128], index: 6, kind: input, shape index: {}]
  %s7 = inlined_call_operand.hbm [shape: f32[8,128], index: 7, kind: output, shape index: {}]
  %s8 = sld [smem:[#allocation0]]
  $region54: #{tpu_custom_call.1} parent=0
    _
  %s10 = ssub.s32 1, %s8
  %s11 = scalar_select 0, %s10, %s8
  $region1: #{tpu_custom_call.1} parent=0
    #allocation2 [shape = 'u8[4096]{0}', space=vmem, size = 0x1000, scoped, tag = 'input window, operand 0, single buffered']
    #allocation3 [shape = 's32[1]{0}', space=sflag, size = 0x4, scoped, tag = 'scoped memory for tpu_custom_call.1']
    #allocation4 [shape = 's32[1]{0}', space=sflag, size = 0x4, scoped, tag = 'scoped memory for tpu_custom_call.1']
    #allocation5 [shape = 'u8[12288]{0}', space=vmem, size = 0x3000, scoped, tag = 'input window, operand 1, single buffered']
    #allocation6 [shape = 's32[1]{0}', space=sflag, size = 0x4, scoped, tag = 'scoped memory for tpu_custom_call.1']
    #allocation7 [shape = 'u8[16384]{0}', space=vmem, size = 0x4000, scoped, tag = 'input window, operand 3, single buffered']
    #allocation8 [shape = 'u8[16384]{0}', space=vmem, size = 0x4000, scoped, tag = 'input window, operand 5, single buffered']
    #allocation9 [shape = 's32[1]{0}', space=sflag, size = 0x4, scoped, tag = 'scoped memory for tpu_custom_call.1']
    #allocation10 [shape = 'u8[4096]{0}', space=vmem, size = 0x1000, scoped, tag = 'output window, operand 0, single buffered']
    %12 = vsyncpa [#allocation3], 0
    %13 = vsyncpa [#allocation6], 0
    %14 = vsyncpa [#allocation9], 0
    %15 = vsyncpa [#allocation4], 0
    // Predicated region
    $region2: #{tpu_custom_call.1} parent=1 // pred_check
      _
    $region3: #{tpu_custom_call.1} parent=1 // pred_check_branch
      %17 = sbr.rel (0) target = $region5
    $region4: #{tpu_custom_call.1} parent=1 // pred_region
      %19 = vsyncadd [#allocation3], 0
      %s21 = sshll.u32 %s0, 4
      %s22 = int_to_ptr.hbm [resolvable:$true] %s21
      %s23 = sshll.u32 [#allocation2], 4
      %s24 = int_to_ptr.vmem [resolvable:$true] %s23
      %26 = dma.hbm_to_vmem [thread:$0]  %s22, 128, %s24, [#allocation3]
    $region5: #{tpu_custom_call.1} parent=1 // pred_fallthru
      _
    // Predicated region
    $region6: #{tpu_custom_call.1} parent=1 // pred_check
      _
    $region7: #{tpu_custom_call.1} parent=1 // pred_check_branch
      %28 = sbr.rel (0) target = $region9
    $region8: #{tpu_custom_call.1} parent=1 // pred_region
      %30 = vsyncadd [#allocation6], 0
      %s31 = sshll.u32 %s1, 4
      %s32 = int_to_ptr.hbm [resolvable:$true] %s31
      %s33 = sshll.u32 [#allocation5], 4
      %s34 = int_to_ptr.vmem [resolvable:$true] %s33
      %39 = dma.hbm_to_vmem [thread:$0]  %s32, 384, %s34, [#allocation6], 128, 128, 8
    $region9: #{tpu_custom_call.1} parent=1 // pred_fallthru
      _
    // Predicated region
    $region10: #{tpu_custom_call.1} parent=1 // pred_check
      _
    $region11: #{tpu_custom_call.1} parent=1 // pred_check_branch
      %41 = sbr.rel (0) target = $region13
    $region12: #{tpu_custom_call.1} parent=1 // pred_region
      _
    $region13: #{tpu_custom_call.1} parent=1 // pred_fallthru
      _
    // Predicated region
    $region14: #{tpu_custom_call.1} parent=1 // pred_check
      _
    $region15: #{tpu_custom_call.1} parent=1 // pred_check_branch
      %43 = sbr.rel (0) target = $region17
    $region16: #{tpu_custom_call.1} parent=1 // pred_region
      %45 = vsyncadd [#allocation6], 0
      %s46 = sshll.u32 %s3, 4
      %s47 = int_to_ptr.hbm [resolvable:$true] %s46
      %s48 = sshll.u32 [#allocation7], 4
      %s49 = int_to_ptr.vmem [resolvable:$true] %s48
      %54 = dma.hbm_to_vmem [thread:$0]  %s47, 512, %s49, [#allocation6], 128, 128, 8
    $region17: #{tpu_custom_call.1} parent=1 // pred_fallthru
      _
    // Predicated region
    $region18: #{tpu_custom_call.1} parent=1 // pred_check
      _
    $region19: #{tpu_custom_call.1} parent=1 // pred_check_branch
      %56 = sbr.rel (0) target = $region21
    $region20: #{tpu_custom_call.1} parent=1 // pred_region
      _
    $region21: #{tpu_custom_call.1} parent=1 // pred_fallthru
      _
    // Predicated region
    $region22: #{tpu_custom_call.1} parent=1 // pred_check
      _
    $region23: #{tpu_custom_call.1} parent=1 // pred_check_branch
      %58 = sbr.rel (0) target = $region25
    $region24: #{tpu_custom_call.1} parent=1 // pred_region
      %60 = vsyncadd [#allocation9], 0
      %s61 = sshll.u32 %s5, 4
      %s62 = int_to_ptr.hbm [resolvable:$true] %s61
      %s63 = sshll.u32 [#allocation8], 4
      %s64 = int_to_ptr.vmem [resolvable:$true] %s63
      %69 = dma.hbm_to_vmem [thread:$0]  %s62, 512, %s64, [#allocation9], 128, 128, 8
    $region25: #{tpu_custom_call.1} parent=1 // pred_fallthru
      _
    // Predicated region
    $region26: #{tpu_custom_call.1} parent=1 // pred_check
      _
    $region27: #{tpu_custom_call.1} parent=1 // pred_check_branch
      %71 = sbr.rel (0) target = $region29
    $region28: #{tpu_custom_call.1} parent=1 // pred_region
      _
    $region29: #{tpu_custom_call.1} parent=1 // pred_fallthru
      _
    // Predicated region
    $region30: #{tpu_custom_call.1} parent=1 // pred_check
      _
    $region31: #{tpu_custom_call.1} parent=1 // pred_check_branch
      %73 = sbr.rel (0) target = $region33
    $region32: #{tpu_custom_call.1} parent=1 // pred_region
      %75 = dma.done [#allocation3], 128
    $region33: #{tpu_custom_call.1} parent=1 // pred_fallthru
      _
    // Predicated region
    $region34: #{tpu_custom_call.1} parent=1 // pred_check
      _
    $region35: #{tpu_custom_call.1} parent=1 // pred_check_branch
      %77 = sbr.rel (0) target = $region37
    $region36: #{tpu_custom_call.1} parent=1 // pred_region
      %79 = dma.done [#allocation6], 384
    $region37: #{tpu_custom_call.1} parent=1 // pred_fallthru
      _
    // Predicated region
    $region38: #{tpu_custom_call.1} parent=1 // pred_check
      _
    $region39: #{tpu_custom_call.1} parent=1 // pred_check_branch
      %81 = sbr.rel (0) target = $region41
    $region40: #{tpu_custom_call.1} parent=1 // pred_region
      %83 = dma.done [#allocation6], 512
    $region41: #{tpu_custom_call.1} parent=1 // pred_fallthru
      _
    // Predicated region
    $region42: #{tpu_custom_call.1} parent=1 // pred_check
      _
    $region43: #{tpu_custom_call.1} parent=1 // pred_check_branch
      %85 = sbr.rel (0) target = $region45
    $region44: #{tpu_custom_call.1} parent=1 // pred_region
      %87 = dma.done [#allocation9], 512
    $region45: #{tpu_custom_call.1} parent=1 // pred_fallthru
      _
    %v88 = vld [vmem:[#allocation2] sm:$0xff]
    %v89 = vld [vmem:[#allocation5] sm:$0xff]
    %v90 = vld [vmem:[#allocation5 + $0x8] sm:$0xff]
    %v91 = vld [vmem:[#allocation5 + $0x10] sm:$0xff]
    %v92 = vld [vmem:[%s2] sm:$0x1]
    %v94 = vperm.slane %v92, 0
    %vm96 = vcmask 195584
    %v98 = vsel %vm96, %v88, 0
    %100 = vmatpush.msra.mxu0 0.0
    %101 = vmatpush.msra.mxu0 0.0
    %102 = vmatpush.msra.mxu0 0.0
    %103 = vmatpush.msra.mxu0 0.0
    %104 = vmatpush.msra.mxu0 0.0
    %105 = vmatpush.msra.mxu0 0.0
    %106 = vmatpush.msra.mxu0 0.0
    %107 = vmatpush.msra.mxu0 0.0
    %108 = vmatpush.msra.mxu0 0.0
    %109 = vmatpush.msra.mxu0 0.0
    %110 = vmatpush.msra.mxu0 0.0
    %111 = vmatpush.msra.mxu0 0.0
    %112 = vmatpush.msra.mxu0 0.0
    %113 = vmatpush.msra.mxu0 %v91
    %114 = vmatpush.msra.mxu0 %v90
    %115 = vmatpush.msra.mxu0 %v89
    %116 = vmatmul.f32.gmra.mxu0 %v98
    %v117 = vpop.f32.mrf.mxu0
    %v118 = vadd.f32 %v94, %v117
    %119 = vdwg.mxu0
    %v120 = vmax.f32 %v118, 0.0
    %v121 = vld [vmem:[#allocation7] sm:$0xff]
    %v122 = vld [vmem:[#allocation7 + $0x8] sm:$0xff]
    %v123 = vld [vmem:[#allocation7 + $0x10] sm:$0xff]
    %v124 = vld [vmem:[#allocation7 + $0x18] sm:$0xff]
    %v125 = vld [vmem:[%s4] sm:$0x1]
    %v127 = vperm.slane %v125, 0
    %vm129 = vcmask 261120
    %v131 = vsel %vm129, %v120, 0
    %133 = vmatpush.msra.mxu0 0.0
    %134 = vmatpush.msra.mxu0 0.0
    %135 = vmatpush.msra.mxu0 0.0
    %136 = vmatpush.msra.mxu0 0.0
    %137 = vmatpush.msra.mxu0 0.0
    %138 = vmatpush.msra.mxu0 0.0
    %139 = vmatpush.msra.mxu0 0.0
    %140 = vmatpush.msra.mxu0 0.0
    %141 = vmatpush.msra.mxu0 0.0
    %142 = vmatpush.msra.mxu0 0.0
    %143 = vmatpush.msra.mxu0 0.0
    %144 = vmatpush.msra.mxu0 0.0
    %145 = vmatpush.msra.mxu0 %v124
    %146 = vmatpush.msra.mxu0 %v123
    %147 = vmatpush.msra.mxu0 %v122
    %148 = vmatpush.msra.mxu0 %v121
    %149 = vmatmul.f32.gmra.mxu0 %v131
    %v150 = vpop.f32.mrf.mxu0
    %v151 = vadd.f32 %v127, %v150
    %152 = vdwg.mxu0
    %v153 = vmax.f32 %v151, 0.0
    %v154 = vld [vmem:[#allocation8] sm:$0xff]
    %v155 = vld [vmem:[#allocation8 + $0x8] sm:$0xff]
    %v156 = vld [vmem:[#allocation8 + $0x10] sm:$0xff]
    %v157 = vld [vmem:[#allocation8 + $0x18] sm:$0xff]
    %v158 = vld [vmem:[%s6] sm:$0x1]
    %v160 = vperm.slane %v158, 0
    %v163 = vsel %vm129, %v153, 0
    %165 = vmatpush.msra.mxu0 0.0
    %166 = vmatpush.msra.mxu0 0.0
    %167 = vmatpush.msra.mxu0 0.0
    %168 = vmatpush.msra.mxu0 0.0
    %169 = vmatpush.msra.mxu0 0.0
    %170 = vmatpush.msra.mxu0 0.0
    %171 = vmatpush.msra.mxu0 0.0
    %172 = vmatpush.msra.mxu0 0.0
    %173 = vmatpush.msra.mxu0 0.0
    %174 = vmatpush.msra.mxu0 0.0
    %175 = vmatpush.msra.mxu0 0.0
    %176 = vmatpush.msra.mxu0 0.0
    %177 = vmatpush.msra.mxu0 %v157
    %178 = vmatpush.msra.mxu0 %v156
    %179 = vmatpush.msra.mxu0 %v155
    %180 = vmatpush.msra.mxu0 %v154
    %181 = vmatmul.f32.gmra.mxu0 %v163
    %v182 = vpop.f32.mrf.mxu0
    %v183 = vadd.f32 %v160, %v182
    %184 = vdwg.mxu0
    %185 = vst [vmem:[#allocation10] sm:$0xff] %v183
    // Predicated region
    $region46: #{tpu_custom_call.1} parent=1 // pred_check
      _
    $region47: #{tpu_custom_call.1} parent=1 // pred_check_branch
      %187 = sbr.rel (0) target = $region49
    $region48: #{tpu_custom_call.1} parent=1 // pred_region
      %189 = vsyncadd [#allocation4], 0
      %s191 = sshll.u32 [#allocation10], 4
      %s192 = int_to_ptr.vmem [resolvable:$true] %s191
      %s193 = sshll.u32 %s7, 4
      %s194 = int_to_ptr.hbm [resolvable:$true] %s193
      %196 = dma.vmem_to_hbm [thread:$0]  %s192, 128, %s194, [#allocation4]
    $region49: #{tpu_custom_call.1} parent=1 // pred_fallthru
      _
    // Predicated region
    $region50: #{tpu_custom_call.1} parent=1 // pred_check
      _
    $region51: #{tpu_custom_call.1} parent=1 // pred_check_branch
      %198 = sbr.rel (0) target = $region53
    $region52: #{tpu_custom_call.1} parent=1 // pred_region
      %200 = dma.done [#allocation4], 128
    $region53: #{tpu_custom_call.1} parent=1 // pred_fallthru
      _
    %201 = vsyncpa [#allocation3], 1
    %202 = vsyncpa [#allocation6], 1
    %203 = vsyncpa [#allocation9], 1
    %204 = vsyncpa [#allocation4], 1

</llo_original>
